<compile_context>
chip_gen: v7x
topology: tpu7x:2x2x1
jax: 0.10.0
libtpu: 0.0.40
codegen_flags: <defaults>
</compile_context>

<pallas_src>
import jax
import jax.numpy as jnp
import numpy as np
from jax.experimental import pallas as pl
from jax.experimental.pallas import tpu as pltpu

# LIF parameters (norse LIFParameters defaults), deterministic, baked in.
TAU_SYN_INV = 200.0
TAU_MEM_INV = 100.0
V_LEAK = 0.0
V_TH = 1.0
V_RESET = 0.0
DT = 0.001  # SNN(..., dt=...)

# Folded per-step constants (Python floats, folded at trace time).
A_MEM = DT * TAU_MEM_INV         # membrane integration coefficient
A_SYN = 1.0 - DT * TAU_SYN_INV   # synaptic-current decay factor

LANES = 128     # lane-dense feature layout (last dim)
SUBLANES = 8    # feature tile: 8 sublanes -> (v, i) carry = 2 f32 vregs total
UNROLL = 8      # static inner unroll of the time loop


def _lif_step(x_t, v, i):
    """One norse lif_feed_forward_step (V_LEAK = 0 folded; exactly equal to
    v + A_MEM*((V_LEAK - v) + i) for V_LEAK == 0.0).  Shared by kernel and
    reference so the correctness check compares identically-computed values."""
    v_dec = v + A_MEM * (i - v)
    spike = v_dec > V_TH
    z = spike.astype(v.dtype)
    v_new = jnp.where(spike, V_RESET, v_dec)
    i_new = i * A_SYN + x_t
    return z, v_new, i_new


def _make_snn_kernel(Tc, rem, n_t):
    """Tc: full-chunk length; rem: length of the last (possibly ragged) chunk;
    n_t: number of time chunks.  All static Python ints."""
    ragged = rem != Tc

    def run_chunk(n_steps, x_ref, z_ref, v_ref, i_ref):
        # n_steps is static -> straight-line, unmasked loads/stores.
        u = min(UNROLL, n_steps)
        n_outer = n_steps // u
        n_tail = n_steps - n_outer * u

        def step(t, v, i):
            z, v, i = _lif_step(x_ref[t], v, i)
            z_ref[t] = z
            return v, i

        # Register-carried state within the chunk; spill to the resident
        # output blocks only at the chunk boundary.
        v = v_ref[...]
        i = i_ref[...]

        def outer(j, carry):
            v, i = carry
            base = pl.multiple_of(j * u, u)
            for k in range(u):
                v, i = step(base + k, v, i)
            return (v, i)

        if n_outer > 0:
            v, i = jax.lax.fori_loop(0, n_outer, outer, (v, i))
        base = n_outer * u  # static
        for k in range(n_tail):
            v, i = step(base + k, v, i)

        v_ref[...] = v
        i_ref[...] = i

    def kernel(v0_ref, i0_ref, x_ref, z_ref, v_ref, i_ref):
        tc = pl.program_id(1)  # time-chunk index (sequential, "arbitrary")

        # v_ref / i_ref have a constant time index_map, so their blocks stay
        # resident in VMEM across the whole time axis (accumulator pattern).
        @pl.when(tc == 0)
        def _():
            v_ref[...] = v0_ref[...]
            i_ref[...] = i0_ref[...]

        if not ragged:
            run_chunk(Tc, x_ref, z_ref, v_ref, i_ref)
        else:
            # Chunk-level split: full chunks run the unmasked Tc-step loop,
            # only the last chunk runs the (shorter, still unmasked) rem-step
            # loop.  No per-timestep masking anywhere.
            @pl.when(tc < n_t - 1)
            def _():
                run_chunk(Tc, x_ref, z_ref, v_ref, i_ref)

            @pl.when(tc == n_t - 1)
            def _():
                run_chunk(rem, x_ref, z_ref, v_ref, i_ref)

    return kernel


def snn_forward(x, state=None, *, block_target_bytes=2 * 1024 * 1024):
    """x: (T, *feat) float32.

    Returns (spikes (T, *feat), (v (*feat), i (*feat))) — equivalent of the
    PyTorch SNN forward with record_states=False.
    """
    x = jnp.asarray(x, jnp.float32)
    T = x.shape[0]
    feat_shape = x.shape[1:]
    F = int(np.prod(feat_shape)) if feat_shape else 1

    # Always lane-dense: pad the flattened feature dim up to R*128 with
    # SUBLANES | R.  Padded neurons (x=0, v=V_LEAK, i=0) never spike and are
    # sliced off below.
    rows_raw = int(pl.cdiv(F, LANES))
    R = max(SUBLANES, ((rows_raw + SUBLANES - 1) // SUBLANES) * SUBLANES)
    Fp = R * LANES
    pad = Fp - F

    x2 = x.reshape(T, F)
    if pad:
        x2 = jnp.pad(x2, ((0, 0), (0, pad)))
    x3 = x2.reshape(T, R, LANES)

    # state_fallback: v = v_leak, i = 0 (unless an explicit state is passed).
    if state is None:
        v0 = jnp.full((R, LANES), V_LEAK, dtype=jnp.float32)
        i0 = jnp.zeros((R, LANES), dtype=jnp.float32)
    else:
        v0f = jnp.asarray(state[0], jnp.float32).reshape(F)
        i0f = jnp.asarray(state[1], jnp.float32).reshape(F)
        if pad:
            v0f = jnp.pad(v0f, (0, pad), constant_values=V_LEAK)
            i0f = jnp.pad(i0f, (0, pad))
        v0 = v0f.reshape(R, LANES)
        i0 = i0f.reshape(R, LANES)

    # Small feature tile (carry fits in vregs); >= 2 tiles whenever F >= 2048
    # so the "parallel" axis feeds both v7x TensorCores.
    Rt = SUBLANES
    n_r = R // Rt

    # Big DMAs come from the time axis: each block is (Tc, 8, 128) f32.
    # ~2 MiB blocks -> ~8 MiB double-buffered x+z pipeline footprint, safe on
    # v5e (16 MiB scoped default) and v7x (64 MiB physical VMEM).
    tile_bytes = Rt * LANES * 4
    Tc = int(max(1, min(T, block_target_bytes // tile_bytes)))
    n_t = int(pl.cdiv(T, Tc))
    rem = T - (n_t - 1) * Tc  # static length of the last chunk

    kernel = _make_snn_kernel(Tc, rem, n_t)

    z3, v, i = pl.pallas_call(
        kernel,
        out_shape=(
            jax.ShapeDtypeStruct((T, R, LANES), jnp.float32),   # spikes
            jax.ShapeDtypeStruct((R, LANES), jnp.float32),      # final v
            jax.ShapeDtypeStruct((R, LANES), jnp.float32),      # final i
        ),
        grid_spec=pltpu.PrefetchScalarGridSpec(
            num_scalar_prefetch=0,
            grid=(n_r, n_t),
            in_specs=[
                pl.BlockSpec((Rt, LANES), lambda r, t: (r, 0)),          # v0
                pl.BlockSpec((Rt, LANES), lambda r, t: (r, 0)),          # i0
                pl.BlockSpec((Tc, Rt, LANES), lambda r, t: (t, r, 0)),   # x
            ],
            out_specs=[
                pl.BlockSpec((Tc, Rt, LANES), lambda r, t: (t, r, 0)),   # z
                pl.BlockSpec((Rt, LANES), lambda r, t: (r, 0)),          # v
                pl.BlockSpec((Rt, LANES), lambda r, t: (r, 0)),          # i
            ],
        ),
        compiler_params=pltpu.CompilerParams(
            dimension_semantics=("parallel", "arbitrary"),
        ),
    )(v0, i0, x3)

    z = z3.reshape(T, Fp)[:, :F].reshape((T,) + feat_shape)
    v_out = v.reshape(Fp)[:F].reshape(feat_shape)
    i_out = i.reshape(Fp)[:F].reshape(feat_shape)
    return z, (v_out, i_out)


def snn_reference(x, state=None):
    """Pure-JAX reference identical to the PyTorch SNN forward w/ LIF step."""
    x = jnp.asarray(x, jnp.float32)
    feat = x.shape[1:]
    if state is None:
        v0 = jnp.full(feat, V_LEAK, dtype=jnp.float32)
        i0 = jnp.zeros(feat, dtype=jnp.float32)
    else:
        v0 = jnp.asarray(state[0], jnp.float32)
        i0 = jnp.asarray(state[1], jnp.float32)

    def step(carry, xt):
        v, i = carry
        z, v_new, i_new = _lif_step(xt, v, i)
        return (v_new, i_new), z

    (vf, i_fin), zs = jax.lax.scan(step, (v0, i0), x)
    return zs, (vf, i_fin)


if __name__ == "__main__":
    # Case 1: lane-aligned features (F = 1024), single time chunk, default
    # initial state.
    T, B, N = 8, 8, 128
    key = jax.random.PRNGKey(0)
    # Scale up a bit so some neurons actually cross threshold.
    x = 10.0 * jax.random.normal(key, (T, B, N), dtype=jnp.float32)

    z, (v, i) = snn_forward(x)
    jax.block_until_ready((z, v, i))

    z_ref, (v_ref, i_ref) = snn_reference(x)
    np.testing.assert_allclose(np.asarray(z), np.asarray(z_ref), atol=1e-5)
    np.testing.assert_allclose(np.asarray(v), np.asarray(v_ref), atol=1e-5)
    np.testing.assert_allclose(np.asarray(i), np.asarray(i_ref), atol=1e-5)

    # Case 2: non-lane-aligned features (padding path), explicit initial
    # state, and a forced small time chunk to exercise the ragged-tail path.
    T2 = 7
    x2 = 10.0 * jax.random.normal(jax.random.PRNGKey(1), (T2, 3, 50), jnp.float32)
    v0 = 0.1 * jax.random.normal(jax.random.PRNGKey(2), (3, 50), jnp.float32)
    i0 = 0.1 * jax.random.normal(jax.random.PRNGKey(3), (3, 50), jnp.float32)

    z2, (v2, i2) = snn_forward(x2, (v0, i0), block_target_bytes=4 * 4096)
    jax.block_until_ready((z2, v2, i2))

    z2_ref, (v2_ref, i2_ref) = snn_reference(x2, (v0, i0))
    np.testing.assert_allclose(np.asarray(z2), np.asarray(z2_ref), atol=1e-5)
    np.testing.assert_allclose(np.asarray(v2), np.asarray(v2_ref), atol=1e-5)
    np.testing.assert_allclose(np.asarray(i2), np.asarray(i2_ref), atol=1e-5)

    print("KERNEL_OK")
</pallas_src>

<mosaic_0001>
module attributes {stable_mosaic.version = 11 : i64} {
  func.func @kernel(%arg0: i32, %arg1: i32, %arg2: memref<8x128xf32, #tpu.memory_space<vmem>>, %arg3: memref<8x128xf32, #tpu.memory_space<vmem>>, %arg4: memref<8x8x128xf32, #tpu.memory_space<vmem>>, %arg5: memref<8x8x128xf32, #tpu.memory_space<vmem>>, %arg6: memref<8x128xf32, #tpu.memory_space<vmem>>, %arg7: memref<8x128xf32, #tpu.memory_space<vmem>>) attributes {dimension_semantics = [#tpu.dimension_semantics<parallel>, #tpu.dimension_semantics<arbitrary>], iteration_bounds = array<i64: 1, 1>, scalar_prefetch = 0 : i64, scratch_operands = 0 : i64, tpu.core_type = #tpu.core_type<tc>, window_params = [{transform_indices = @transform_0, window_bounds = array<i64: 8, 128>}, {transform_indices = @transform_1, window_bounds = array<i64: 8, 128>}, {transform_indices = @transform_2, window_bounds = array<i64: 8, 8, 128>}, {transform_indices = @transform_3, window_bounds = array<i64: 8, 8, 128>}, {transform_indices = @transform_4, window_bounds = array<i64: 8, 128>}, {transform_indices = @transform_5, window_bounds = array<i64: 8, 128>}]} {
    %c0_i32 = arith.constant 0 : i32
    %0 = arith.cmpi eq, %arg1, %c0_i32 : i32
    %1 = arith.extui %0 : i1 to i32
    %c0_i32_0 = arith.constant 0 : i32
    %2 = arith.cmpi ne, %1, %c0_i32_0 : i32
    scf.if %2 {
      %c0_74 = arith.constant 0 : index
      %c0_75 = arith.constant 0 : index
      %177 = vector.load %arg2[%c0_74, %c0_75] : memref<8x128xf32, #tpu.memory_space<vmem>>, vector<8x128xf32>
      %c0_76 = arith.constant 0 : index
      %c0_77 = arith.constant 0 : index
      %178 = vector.load %arg6[%c0_76, %c0_77] : memref<8x128xf32, #tpu.memory_space<vmem>>, vector<8x128xf32>
      tpu.vector_store %arg6[%c0_76, %c0_77], %177 {strides = array<i32>} : memref<8x128xf32, #tpu.memory_space<vmem>>, vector<8x128xf32>,
      %c0_78 = arith.constant 0 : index
      %c0_79 = arith.constant 0 : index
      %179 = vector.load %arg3[%c0_78, %c0_79] : memref<8x128xf32, #tpu.memory_space<vmem>>, vector<8x128xf32>
      %c0_80 = arith.constant 0 : index
      %c0_81 = arith.constant 0 : index
      %180 = vector.load %arg7[%c0_80, %c0_81] : memref<8x128xf32, #tpu.memory_space<vmem>>, vector<8x128xf32>
      tpu.vector_store %arg7[%c0_80, %c0_81], %179 {strides = array<i32>} : memref<8x128xf32, #tpu.memory_space<vmem>>, vector<8x128xf32>,
    } else {
    }
    %c0 = arith.constant 0 : index
    %c0_1 = arith.constant 0 : index
    %3 = vector.load %arg6[%c0, %c0_1] : memref<8x128xf32, #tpu.memory_space<vmem>>, vector<8x128xf32>
    %c0_2 = arith.constant 0 : index
    %c0_3 = arith.constant 0 : index
    %4 = vector.load %arg7[%c0_2, %c0_3] : memref<8x128xf32, #tpu.memory_space<vmem>>, vector<8x128xf32>
    %c0_i32_4 = arith.constant 0 : i32
    %c8_i32 = arith.constant 8 : i32
    %5 = arith.muli %c0_i32_4, %c8_i32 : i32
    %6 = tpu.assume_multiple %5, 8 : i32
    %c0_i32_5 = arith.constant 0 : i32
    %7 = arith.addi %6, %c0_i32_5 : i32
    %8 = arith.index_cast %7 : i32 to index
    %c0_6 = arith.constant 0 : index
    %c0_7 = arith.constant 0 : index
    %9 = vector.load %arg4[%8, %c0_6, %c0_7] : memref<8x8x128xf32, #tpu.memory_space<vmem>>, vector<1x8x128xf32>
    %10 = vector.shape_cast %9 : vector<1x8x128xf32> to vector<8x128xf32>
    %11 = arith.subf %4, %3 : vector<8x128xf32>
    %cst = arith.constant 1.000000e-01 : f32
    %12 = vector.broadcast %cst : f32 to vector<8x128xf32>
    %13 = arith.mulf %12, %11 : vector<8x128xf32>
    %14 = arith.addf %3, %13 : vector<8x128xf32>
    %cst_8 = arith.constant 1.000000e+00 : f32
    %15 = vector.broadcast %cst_8 : f32 to vector<8x128xf32>
    %16 = arith.cmpf ogt, %14, %15 : vector<8x128xf32>
    %17 = arith.extui %16 : vector<8x128xi1> to vector<8x128xi32>
    %18 = arith.sitofp %17 : vector<8x128xi32> to vector<8x128xf32>
    %cst_9 = arith.constant 0.000000e+00 : f32
    %19 = vector.broadcast %cst_9 : f32 to vector<8x128xf32>
    %20 = arith.select %16, %19, %14 : vector<8x128xi1>, vector<8x128xf32>
    %cst_10 = arith.constant 8.000000e-01 : f32
    %21 = vector.broadcast %cst_10 : f32 to vector<8x128xf32>
    %22 = arith.mulf %4, %21 : vector<8x128xf32>
    %23 = arith.addf %22, %10 : vector<8x128xf32>
    %24 = arith.index_cast %7 : i32 to index
    %c0_11 = arith.constant 0 : index
    %c0_12 = arith.constant 0 : index
    %25 = vector.load %arg5[%24, %c0_11, %c0_12] : memref<8x8x128xf32, #tpu.memory_space<vmem>>, vector<1x8x128xf32>
    %26 = vector.shape_cast %25 : vector<1x8x128xf32> to vector<8x128xf32>
    %27 = vector.shape_cast %18 : vector<8x128xf32> to vector<1x8x128xf32>
    tpu.vector_store %arg5[%24, %c0_11, %c0_12], %27 {strides = array<i32>} : memref<8x8x128xf32, #tpu.memory_space<vmem>>, vector<1x8x128xf32>,
    %c1_i32 = arith.constant 1 : i32
    %28 = arith.addi %6, %c1_i32 : i32
    %29 = arith.index_cast %28 : i32 to index
    %c0_13 = arith.constant 0 : index
    %c0_14 = arith.constant 0 : index
    %30 = vector.load %arg4[%29, %c0_13, %c0_14] : memref<8x8x128xf32, #tpu.memory_space<vmem>>, vector<1x8x128xf32>
    %31 = vector.shape_cast %30 : vector<1x8x128xf32> to vector<8x128xf32>
    %32 = arith.subf %23, %20 : vector<8x128xf32>
    %cst_15 = arith.constant 1.000000e-01 : f32
    %33 = vector.broadcast %cst_15 : f32 to vector<8x128xf32>
    %34 = arith.mulf %33, %32 : vector<8x128xf32>
    %35 = arith.addf %20, %34 : vector<8x128xf32>
    %cst_16 = arith.constant 1.000000e+00 : f32
    %36 = vector.broadcast %cst_16 : f32 to vector<8x128xf32>
    %37 = arith.cmpf ogt, %35, %36 : vector<8x128xf32>
    %38 = arith.extui %37 : vector<8x128xi1> to vector<8x128xi32>
    %39 = arith.sitofp %38 : vector<8x128xi32> to vector<8x128xf32>
    %cst_17 = arith.constant 0.000000e+00 : f32
    %40 = vector.broadcast %cst_17 : f32 to vector<8x128xf32>
    %41 = arith.select %37, %40, %35 : vector<8x128xi1>, vector<8x128xf32>
    %cst_18 = arith.constant 8.000000e-01 : f32
    %42 = vector.broadcast %cst_18 : f32 to vector<8x128xf32>
    %43 = arith.mulf %23, %42 : vector<8x128xf32>
    %44 = arith.addf %43, %31 : vector<8x128xf32>
    %45 = arith.index_cast %28 : i32 to index
    %c0_19 = arith.constant 0 : index
    %c0_20 = arith.constant 0 : index
    %46 = vector.load %arg5[%45, %c0_19, %c0_20] : memref<8x8x128xf32, #tpu.memory_space<vmem>>, vector<1x8x128xf32>
    %47 = vector.shape_cast %46 : vector<1x8x128xf32> to vector<8x128xf32>
    %48 = vector.shape_cast %39 : vector<8x128xf32> to vector<1x8x128xf32>
    tpu.vector_store %arg5[%45, %c0_19, %c0_20], %48 {strides = array<i32>} : memref<8x8x128xf32, #tpu.memory_space<vmem>>, vector<1x8x128xf32>,
    %c2_i32 = arith.constant 2 : i32
    %49 = arith.addi %6, %c2_i32 : i32
    %50 = arith.index_cast %49 : i32 to index
    %c0_21 = arith.constant 0 : index
    %c0_22 = arith.constant 0 : index
    %51 = vector.load %arg4[%50, %c0_21, %c0_22] : memref<8x8x128xf32, #tpu.memory_space<vmem>>, vector<1x8x128xf32>
    %52 = vector.shape_cast %51 : vector<1x8x128xf32> to vector<8x128xf32>
    %53 = arith.subf %44, %41 : vector<8x128xf32>
    %cst_23 = arith.constant 1.000000e-01 : f32
    %54 = vector.broadcast %cst_23 : f32 to vector<8x128xf32>
    %55 = arith.mulf %54, %53 : vector<8x128xf32>
    %56 = arith.addf %41, %55 : vector<8x128xf32>
    %cst_24 = arith.constant 1.000000e+00 : f32
    %57 = vector.broadcast %cst_24 : f32 to vector<8x128xf32>
    %58 = arith.cmpf ogt, %56, %57 : vector<8x128xf32>
    %59 = arith.extui %58 : vector<8x128xi1> to vector<8x128xi32>
    %60 = arith.sitofp %59 : vector<8x128xi32> to vector<8x128xf32>
    %cst_25 = arith.constant 0.000000e+00 : f32
    %61 = vector.broadcast %cst_25 : f32 to vector<8x128xf32>
    %62 = arith.select %58, %61, %56 : vector<8x128xi1>, vector<8x128xf32>
    %cst_26 = arith.constant 8.000000e-01 : f32
    %63 = vector.broadcast %cst_26 : f32 to vector<8x128xf32>
    %64 = arith.mulf %44, %63 : vector<8x128xf32>
    %65 = arith.addf %64, %52 : vector<8x128xf32>
    %66 = arith.index_cast %49 : i32 to index
    %c0_27 = arith.constant 0 : index
    %c0_28 = arith.constant 0 : index
    %67 = vector.load %arg5[%66, %c0_27, %c0_28] : memref<8x8x128xf32, #tpu.memory_space<vmem>>, vector<1x8x128xf32>
    %68 = vector.shape_cast %67 : vector<1x8x128xf32> to vector<8x128xf32>
    %69 = vector.shape_cast %60 : vector<8x128xf32> to vector<1x8x128xf32>
    tpu.vector_store %arg5[%66, %c0_27, %c0_28], %69 {strides = array<i32>} : memref<8x8x128xf32, #tpu.memory_space<vmem>>, vector<1x8x128xf32>,
    %c3_i32 = arith.constant 3 : i32
    %70 = arith.addi %6, %c3_i32 : i32
    %71 = arith.index_cast %70 : i32 to index
    %c0_29 = arith.constant 0 : index
    %c0_30 = arith.constant 0 : index
    %72 = vector.load %arg4[%71, %c0_29, %c0_30] : memref<8x8x128xf32, #tpu.memory_space<vmem>>, vector<1x8x128xf32>
    %73 = vector.shape_cast %72 : vector<1x8x128xf32> to vector<8x128xf32>
    %74 = arith.subf %65, %62 : vector<8x128xf32>
    %cst_31 = arith.constant 1.000000e-01 : f32
    %75 = vector.broadcast %cst_31 : f32 to vector<8x128xf32>
    %76 = arith.mulf %75, %74 : vector<8x128xf32>
    %77 = arith.addf %62, %76 : vector<8x128xf32>
    %cst_32 = arith.constant 1.000000e+00 : f32
    %78 = vector.broadcast %cst_32 : f32 to vector<8x128xf32>
    %79 = arith.cmpf ogt, %77, %78 : vector<8x128xf32>
    %80 = arith.extui %79 : vector<8x128xi1> to vector<8x128xi32>
    %81 = arith.sitofp %80 : vector<8x128xi32> to vector<8x128xf32>
    %cst_33 = arith.constant 0.000000e+00 : f32
    %82 = vector.broadcast %cst_33 : f32 to vector<8x128xf32>
    %83 = arith.select %79, %82, %77 : vector<8x128xi1>, vector<8x128xf32>
    %cst_34 = arith.constant 8.000000e-01 : f32
    %84 = vector.broadcast %cst_34 : f32 to vector<8x128xf32>
    %85 = arith.mulf %65, %84 : vector<8x128xf32>
    %86 = arith.addf %85, %73 : vector<8x128xf32>
    %87 = arith.index_cast %70 : i32 to index
    %c0_35 = arith.constant 0 : index
    %c0_36 = arith.constant 0 : index
    %88 = vector.load %arg5[%87, %c0_35, %c0_36] : memref<8x8x128xf32, #tpu.memory_space<vmem>>, vector<1x8x128xf32>
    %89 = vector.shape_cast %88 : vector<1x8x128xf32> to vector<8x128xf32>
    %90 = vector.shape_cast %81 : vector<8x128xf32> to vector<1x8x128xf32>
    tpu.vector_store %arg5[%87, %c0_35, %c0_36], %90 {strides = array<i32>} : memref<8x8x128xf32, #tpu.memory_space<vmem>>, vector<1x8x128xf32>,
    %c4_i32 = arith.constant 4 : i32
    %91 = arith.addi %6, %c4_i32 : i32
    %92 = arith.index_cast %91 : i32 to index
    %c0_37 = arith.constant 0 : index
    %c0_38 = arith.constant 0 : index
    %93 = vector.load %arg4[%92, %c0_37, %c0_38] : memref<8x8x128xf32, #tpu.memory_space<vmem>>, vector<1x8x128xf32>
    %94 = vector.shape_cast %93 : vector<1x8x128xf32> to vector<8x128xf32>
    %95 = arith.subf %86, %83 : vector<8x128xf32>
    %cst_39 = arith.constant 1.000000e-01 : f32
    %96 = vector.broadcast %cst_39 : f32 to vector<8x128xf32>
    %97 = arith.mulf %96, %95 : vector<8x128xf32>
    %98 = arith.addf %83, %97 : vector<8x128xf32>
    %cst_40 = arith.constant 1.000000e+00 : f32
    %99 = vector.broadcast %cst_40 : f32 to vector<8x128xf32>
    %100 = arith.cmpf ogt, %98, %99 : vector<8x128xf32>
    %101 = arith.extui %100 : vector<8x128xi1> to vector<8x128xi32>
    %102 = arith.sitofp %101 : vector<8x128xi32> to vector<8x128xf32>
    %cst_41 = arith.constant 0.000000e+00 : f32
    %103 = vector.broadcast %cst_41 : f32 to vector<8x128xf32>
    %104 = arith.select %100, %103, %98 : vector<8x128xi1>, vector<8x128xf32>
    %cst_42 = arith.constant 8.000000e-01 : f32
    %105 = vector.broadcast %cst_42 : f32 to vector<8x128xf32>
    %106 = arith.mulf %86, %105 : vector<8x128xf32>
    %107 = arith.addf %106, %94 : vector<8x128xf32>
    %108 = arith.index_cast %91 : i32 to index
    %c0_43 = arith.constant 0 : index
    %c0_44 = arith.constant 0 : index
    %109 = vector.load %arg5[%108, %c0_43, %c0_44] : memref<8x8x128xf32, #tpu.memory_space<vmem>>, vector<1x8x128xf32>
    %110 = vector.shape_cast %109 : vector<1x8x128xf32> to vector<8x128xf32>
    %111 = vector.shape_cast %102 : vector<8x128xf32> to vector<1x8x128xf32>
    tpu.vector_store %arg5[%108, %c0_43, %c0_44], %111 {strides = array<i32>} : memref<8x8x128xf32, #tpu.memory_space<vmem>>, vector<1x8x128xf32>,
    %c5_i32 = arith.constant 5 : i32
    %112 = arith.addi %6, %c5_i32 : i32
    %113 = arith.index_cast %112 : i32 to index
    %c0_45 = arith.constant 0 : index
    %c0_46 = arith.constant 0 : index
    %114 = vector.load %arg4[%113, %c0_45, %c0_46] : memref<8x8x128xf32, #tpu.memory_space<vmem>>, vector<1x8x128xf32>
    %115 = vector.shape_cast %114 : vector<1x8x128xf32> to vector<8x128xf32>
    %116 = arith.subf %107, %104 : vector<8x128xf32>
    %cst_47 = arith.constant 1.000000e-01 : f32
    %117 = vector.broadcast %cst_47 : f32 to vector<8x128xf32>
    %118 = arith.mulf %117, %116 : vector<8x128xf32>
    %119 = arith.addf %104, %118 : vector<8x128xf32>
    %cst_48 = arith.constant 1.000000e+00 : f32
    %120 = vector.broadcast %cst_48 : f32 to vector<8x128xf32>
    %121 = arith.cmpf ogt, %119, %120 : vector<8x128xf32>
    %122 = arith.extui %121 : vector<8x128xi1> to vector<8x128xi32>
    %123 = arith.sitofp %122 : vector<8x128xi32> to vector<8x128xf32>
    %cst_49 = arith.constant 0.000000e+00 : f32
    %124 = vector.broadcast %cst_49 : f32 to vector<8x128xf32>
    %125 = arith.select %121, %124, %119 : vector<8x128xi1>, vector<8x128xf32>
    %cst_50 = arith.constant 8.000000e-01 : f32
    %126 = vector.broadcast %cst_50 : f32 to vector<8x128xf32>
    %127 = arith.mulf %107, %126 : vector<8x128xf32>
    %128 = arith.addf %127, %115 : vector<8x128xf32>
    %129 = arith.index_cast %112 : i32 to index
    %c0_51 = arith.constant 0 : index
    %c0_52 = arith.constant 0 : index
    %130 = vector.load %arg5[%129, %c0_51, %c0_52] : memref<8x8x128xf32, #tpu.memory_space<vmem>>, vector<1x8x128xf32>
    %131 = vector.shape_cast %130 : vector<1x8x128xf32> to vector<8x128xf32>
    %132 = vector.shape_cast %123 : vector<8x128xf32> to vector<1x8x128xf32>
    tpu.vector_store %arg5[%129, %c0_51, %c0_52], %132 {strides = array<i32>} : memref<8x8x128xf32, #tpu.memory_space<vmem>>, vector<1x8x128xf32>,
    %c6_i32 = arith.constant 6 : i32
    %133 = arith.addi %6, %c6_i32 : i32
    %134 = arith.index_cast %133 : i32 to index
    %c0_53 = arith.constant 0 : index
    %c0_54 = arith.constant 0 : index
    %135 = vector.load %arg4[%134, %c0_53, %c0_54] : memref<8x8x128xf32, #tpu.memory_space<vmem>>, vector<1x8x128xf32>
    %136 = vector.shape_cast %135 : vector<1x8x128xf32> to vector<8x128xf32>
    %137 = arith.subf %128, %125 : vector<8x128xf32>
    %cst_55 = arith.constant 1.000000e-01 : f32
    %138 = vector.broadcast %cst_55 : f32 to vector<8x128xf32>
    %139 = arith.mulf %138, %137 : vector<8x128xf32>
    %140 = arith.addf %125, %139 : vector<8x128xf32>
    %cst_56 = arith.constant 1.000000e+00 : f32
    %141 = vector.broadcast %cst_56 : f32 to vector<8x128xf32>
    %142 = arith.cmpf ogt, %140, %141 : vector<8x128xf32>
    %143 = arith.extui %142 : vector<8x128xi1> to vector<8x128xi32>
    %144 = arith.sitofp %143 : vector<8x128xi32> to vector<8x128xf32>
    %cst_57 = arith.constant 0.000000e+00 : f32
    %145 = vector.broadcast %cst_57 : f32 to vector<8x128xf32>
    %146 = arith.select %142, %145, %140 : vector<8x128xi1>, vector<8x128xf32>
    %cst_58 = arith.constant 8.000000e-01 : f32
    %147 = vector.broadcast %cst_58 : f32 to vector<8x128xf32>
    %148 = arith.mulf %128, %147 : vector<8x128xf32>
    %149 = arith.addf %148, %136 : vector<8x128xf32>
    %150 = arith.index_cast %133 : i32 to index
    %c0_59 = arith.constant 0 : index
    %c0_60 = arith.constant 0 : index
    %151 = vector.load %arg5[%150, %c0_59, %c0_60] : memref<8x8x128xf32, #tpu.memory_space<vmem>>, vector<1x8x128xf32>
    %152 = vector.shape_cast %151 : vector<1x8x128xf32> to vector<8x128xf32>
    %153 = vector.shape_cast %144 : vector<8x128xf32> to vector<1x8x128xf32>
    tpu.vector_store %arg5[%150, %c0_59, %c0_60], %153 {strides = array<i32>} : memref<8x8x128xf32, #tpu.memory_space<vmem>>, vector<1x8x128xf32>,
    %c7_i32 = arith.constant 7 : i32
    %154 = arith.addi %6, %c7_i32 : i32
    %155 = arith.index_cast %154 : i32 to index
    %c0_61 = arith.constant 0 : index
    %c0_62 = arith.constant 0 : index
    %156 = vector.load %arg4[%155, %c0_61, %c0_62] : memref<8x8x128xf32, #tpu.memory_space<vmem>>, vector<1x8x128xf32>
    %157 = vector.shape_cast %156 : vector<1x8x128xf32> to vector<8x128xf32>
    %158 = arith.subf %149, %146 : vector<8x128xf32>
    %cst_63 = arith.constant 1.000000e-01 : f32
    %159 = vector.broadcast %cst_63 : f32 to vector<8x128xf32>
    %160 = arith.mulf %159, %158 : vector<8x128xf32>
    %161 = arith.addf %146, %160 : vector<8x128xf32>
    %cst_64 = arith.constant 1.000000e+00 : f32
    %162 = vector.broadcast %cst_64 : f32 to vector<8x128xf32>
    %163 = arith.cmpf ogt, %161, %162 : vector<8x128xf32>
    %164 = arith.extui %163 : vector<8x128xi1> to vector<8x128xi32>
    %165 = arith.sitofp %164 : vector<8x128xi32> to vector<8x128xf32>
    %cst_65 = arith.constant 0.000000e+00 : f32
    %166 = vector.broadcast %cst_65 : f32 to vector<8x128xf32>
    %167 = arith.select %163, %166, %161 : vector<8x128xi1>, vector<8x128xf32>
    %cst_66 = arith.constant 8.000000e-01 : f32
    %168 = vector.broadcast %cst_66 : f32 to vector<8x128xf32>
    %169 = arith.mulf %149, %168 : vector<8x128xf32>
    %170 = arith.addf %169, %157 : vector<8x128xf32>
    %171 = arith.index_cast %154 : i32 to index
    %c0_67 = arith.constant 0 : index
    %c0_68 = arith.constant 0 : index
    %172 = vector.load %arg5[%171, %c0_67, %c0_68] : memref<8x8x128xf32, #tpu.memory_space<vmem>>, vector<1x8x128xf32>
    %173 = vector.shape_cast %172 : vector<1x8x128xf32> to vector<8x128xf32>
    %174 = vector.shape_cast %165 : vector<8x128xf32> to vector<1x8x128xf32>
    tpu.vector_store %arg5[%171, %c0_67, %c0_68], %174 {strides = array<i32>} : memref<8x8x128xf32, #tpu.memory_space<vmem>>, vector<1x8x128xf32>,
    %c1_i32_69 = arith.constant 1 : i32
    %c0_70 = arith.constant 0 : index
    %c0_71 = arith.constant 0 : index
    %175 = vector.load %arg6[%c0_70, %c0_71] : memref<8x128xf32, #tpu.memory_space<vmem>>, vector<8x128xf32>
    tpu.vector_store %arg6[%c0_70, %c0_71], %167 {strides = array<i32>} : memref<8x128xf32, #tpu.memory_space<vmem>>, vector<8x128xf32>,
    %c0_72 = arith.constant 0 : index
    %c0_73 = arith.constant 0 : index
    %176 = vector.load %arg7[%c0_72, %c0_73] : memref<8x128xf32, #tpu.memory_space<vmem>>, vector<8x128xf32>
    tpu.vector_store %arg7[%c0_72, %c0_73], %170 {strides = array<i32>} : memref<8x128xf32, #tpu.memory_space<vmem>>, vector<8x128xf32>,
    return
  }
  func.func @transform_0(%arg0: i32, %arg1: i32) -> (i32, i32) {
    %c0_i32 = arith.constant 0 : i32
    %c0_i32_0 = arith.constant 0 : i32
    return %arg0, %c0_i32 : i32, i32
  }
  func.func @transform_1(%arg0: i32, %arg1: i32) -> (i32, i32) {
    %c0_i32 = arith.constant 0 : i32
    %c0_i32_0 = arith.constant 0 : i32
    return %arg0, %c0_i32 : i32, i32
  }
  func.func @transform_2(%arg0: i32, %arg1: i32) -> (i32, i32, i32) {
    %c0_i32 = arith.constant 0 : i32
    %c0_i32_0 = arith.constant 0 : i32
    return %arg1, %arg0, %c0_i32 : i32, i32, i32
  }
  func.func @transform_3(%arg0: i32, %arg1: i32) -> (i32, i32, i32) {
    %c0_i32 = arith.constant 0 : i32
    %c0_i32_0 = arith.constant 0 : i32
    return %arg1, %arg0, %c0_i32 : i32, i32, i32
  }
  func.func @transform_4(%arg0: i32, %arg1: i32) -> (i32, i32) {
    %c0_i32 = arith.constant 0 : i32
    %c0_i32_0 = arith.constant 0 : i32
    return %arg0, %c0_i32 : i32, i32
  }
  func.func @transform_5(%arg0: i32, %arg1: i32) -> (i32, i32) {
    %c0_i32 = arith.constant 0 : i32
    %c0_i32_0 = arith.constant 0 : i32
    return %arg0, %c0_i32 : i32, i32
  }
}

</mosaic_0001>

<llo_original>
// kernel: tpu_custom_call.1
$region0: #{tpu_custom_call.1}
  #allocation0 [shape = 'u32[]', space=smem, size = 0x4, offset = 0x4, fixed_abs, tag = 'smem constant byte address 0x4 - core index']
  #allocation1 [shape = 'u32[144,128]{1,0:T(1,128)}', space=vmem, size = 0x12000, scoped, tag = 'internal scratch']
  %s0 = inlined_call_operand.hbm [shape: f32[8,128], index: 0, kind: input, shape index: {}]
  %s1 = inlined_call_operand.hbm [shape: f32[8,128], index: 1, kind: input, shape index: {}]
  %s2 = inlined_call_operand.hbm [shape: f32[8,8,128], index: 2, kind: input, shape index: {}]
  %s3 = inlined_call_operand.hbm [shape: f32[8,8,128], index: 3, kind: output, shape index: {0}]
  %s4 = inlined_call_operand.hbm [shape: f32[8,128], index: 4, kind: output, shape index: {1}]
  %s5 = inlined_call_operand.hbm [shape: f32[8,128], index: 5, kind: output, shape index: {2}]
  %6 = xla_tuple %s3, %s4, %s5
  %s7 = sld [smem:[#allocation0]]
  $region54: #{tpu_custom_call.1} parent=0
    _
  %s9 = ssub.s32 1, %s7
  %s10 = scalar_select 0, %s9, %s7
  $region1: #{tpu_custom_call.1} parent=0
    #allocation2 [shape = 'u8[4096]{0}', space=vmem, size = 0x1000, scoped, tag = 'input window, operand 0, single buffered']
    #allocation3 [shape = 's32[1]{0}', space=sflag, size = 0x4, scoped, tag = 'scoped memory for tpu_custom_call.1']
    #allocation4 [shape = 's32[1]{0}', space=sflag, size = 0x4, scoped, tag = 'scoped memory for tpu_custom_call.1']
    #allocation5 [shape = 'u8[4096]{0}', space=vmem, size = 0x1000, scoped, tag = 'input window, operand 1, single buffered']
    #allocation6 [shape = 's32[1]{0}', space=sflag, size = 0x4, scoped, tag = 'scoped memory for tpu_custom_call.1']
    #allocation7 [shape = 'u8[32768]{0}', space=vmem, size = 0x8000, scoped, tag = 'input window, operand 2, single buffered']
    #allocation8 [shape = 'u8[32768]{0}', space=vmem, size = 0x8000, scoped, tag = 'output window, operand 0, single buffered']
    #allocation9 [shape = 'u8[4096]{0}', space=vmem, size = 0x1000, scoped, tag = 'output window, operand 1, single buffered']
    #allocation10 [shape = 's32[1]{0}', space=sflag, size = 0x4, scoped, tag = 'scoped memory for tpu_custom_call.1']
    #allocation11 [shape = 'u8[4096]{0}', space=vmem, size = 0x1000, scoped, tag = 'output window, operand 2, single buffered']
    %11 = vsyncpa [#allocation3], 0
    %12 = vsyncpa [#allocation6], 0
    %13 = vsyncpa [#allocation4], 0
    %14 = vsyncpa [#allocation10], 0
    // Predicated region
    $region2: #{tpu_custom_call.1} parent=1 // pred_check
      _
    $region3: #{tpu_custom_call.1} parent=1 // pred_check_branch
      %16 = sbr.rel (0) target = $region5
    $region4: #{tpu_custom_call.1} parent=1 // pred_region
      %s18 = ssub.s32 128, 128
      %19 = vsyncadd [#allocation3], %s18
      %s21 = sshll.u32 [#allocation2], 4
      %s22 = int_to_ptr.vmem [resolvable:$true] %s21
      %24 = dma.hbm_to_vmem [thread:$0]  %s0, 128, %s22, [#allocation3]
    $region5: #{tpu_custom_call.1} parent=1 // pred_fallthru
      _
    // Predicated region
    $region6: #{tpu_custom_call.1} parent=1 // pred_check
      _
    $region7: #{tpu_custom_call.1} parent=1 // pred_check_branch
      %26 = sbr.rel (0) target = $region9
    $region8: #{tpu_custom_call.1} parent=1 // pred_region
      %s28 = ssub.s32 128, 128
      %29 = vsyncadd [#allocation6], %s28
      %s31 = sshll.u32 [#allocation5], 4
      %s32 = int_to_ptr.vmem [resolvable:$true] %s31
      %34 = dma.hbm_to_vmem [thread:$0]  %s1, 128, %s32, [#allocation6]
    $region9: #{tpu_custom_call.1} parent=1 // pred_fallthru
      _
    // Predicated region
    $region10: #{tpu_custom_call.1} parent=1 // pred_check
      _
    $region11: #{tpu_custom_call.1} parent=1 // pred_check_branch
      %36 = sbr.rel (0) target = $region13
    $region12: #{tpu_custom_call.1} parent=1 // pred_region
      %s38 = ssub.s32 1024, 1024
      %39 = vsyncadd [#allocation6], %s38
      %s40 = sshll.u32 [#allocation7], 4
      %s41 = int_to_ptr.vmem [resolvable:$true] %s40
      %46 = dma.hbm_to_vmem [thread:$0]  %s2, 1024, %s41, [#allocation6], 128, 128, 8
    $region13: #{tpu_custom_call.1} parent=1 // pred_fallthru
      _
    // Predicated region
    $region14: #{tpu_custom_call.1} parent=1 // pred_check
      _
    $region15: #{tpu_custom_call.1} parent=1 // pred_check_branch
      %48 = sbr.rel (0) target = $region17
    $region16: #{tpu_custom_call.1} parent=1 // pred_region
      %49 = dma.done [#allocation3], 128
    $region17: #{tpu_custom_call.1} parent=1 // pred_fallthru
      _
    // Predicated region
    $region18: #{tpu_custom_call.1} parent=1 // pred_check
      _
    $region19: #{tpu_custom_call.1} parent=1 // pred_check_branch
      %51 = sbr.rel (0) target = $region21
    $region20: #{tpu_custom_call.1} parent=1 // pred_region
      %52 = dma.done [#allocation6], 128
    $region21: #{tpu_custom_call.1} parent=1 // pred_fallthru
      _
    // Predicated region
    $region22: #{tpu_custom_call.1} parent=1 // pred_check
      _
    $region23: #{tpu_custom_call.1} parent=1 // pred_check_branch
      %54 = sbr.rel (0) target = $region25
    $region24: #{tpu_custom_call.1} parent=1 // pred_region
      %55 = dma.done [#allocation6], 1024
    $region25: #{tpu_custom_call.1} parent=1 // pred_fallthru
      _
    %p56 = scmp.eq.s32.totalorder 0, 0
    // Predicated region
    $region26: #{tpu_custom_call.1} parent=1 // pred_check
      %p57 = pneg %p56
    $region27: #{tpu_custom_call.1} parent=1 // pred_check_branch
      %59 = sbr.rel (%p57) target = $region29
    $region28: #{tpu_custom_call.1} parent=1 // pred_region
      %v60 = vld [vmem:[#allocation2] sm:$0xff]
      %61 = vst [vmem:[#allocation9] sm:$0xff] %v60
      %v62 = vld [vmem:[#allocation5] sm:$0xff]
      %63 = vst [vmem:[#allocation11] sm:$0xff] %v62
    $region29: #{tpu_custom_call.1} parent=1 // pred_fallthru
      _
    %v64 = vld [vmem:[#allocation9] sm:$0xff]
    %v65 = vld [vmem:[#allocation11] sm:$0xff]
    %s66 = smul.u32 0, 8
    %s67 = scalar_lea.vmem [#allocation7], %s66
    %v68 = vld [vmem:[%s67] sm:$0xff]
    %v69 = vsub.f32 %v65, %v64
    %v70 = vmul.f32 %v69, 0.1
    %v71 = vadd.f32 %v64, %v70
    %vm72 = vcmp.gt.f32.partialorder %v71, 1.0
    %v73 = vsel %vm72, 1, 0
    %v74 = vcvt.s32.f32 %v73
    %v75 = vsel %vm72, 0.0, %v71
    %v76 = vmul.f32 %v65, 0.8
    %v77 = vadd.f32 %v76, %v68
    %s78 = scalar_lea.vmem [#allocation8], %s66
    %79 = vst [vmem:[%s78] sm:$0xff] %v74
    %s80 = sadd.s32 0, 1
    %s81 = smul.u32 %s80, 8
    %s82 = scalar_lea.vmem [#allocation7], %s81
    %v83 = vld [vmem:[%s82] sm:$0xff]
    %v84 = vsub.f32 %v77, %v75
    %v85 = vmul.f32 %v84, 0.1
    %v86 = vadd.f32 %v75, %v85
    %vm87 = vcmp.gt.f32.partialorder %v86, 1.0
    %v88 = vsel %vm87, 1, 0
    %v89 = vcvt.s32.f32 %v88
    %v90 = vsel %vm87, 0.0, %v86
    %v91 = vmul.f32 %v77, 0.8
    %v92 = vadd.f32 %v91, %v83
    %s93 = scalar_lea.vmem [#allocation8], %s81
    %94 = vst [vmem:[%s93] sm:$0xff] %v89
    %s95 = sadd.s32 0, 2
    %s96 = smul.u32 %s95, 8
    %s97 = scalar_lea.vmem [#allocation7], %s96
    %v98 = vld [vmem:[%s97] sm:$0xff]
    %v99 = vsub.f32 %v92, %v90
    %v100 = vmul.f32 %v99, 0.1
    %v101 = vadd.f32 %v90, %v100
    %vm102 = vcmp.gt.f32.partialorder %v101, 1.0
    %v103 = vsel %vm102, 1, 0
    %v104 = vcvt.s32.f32 %v103
    %v105 = vsel %vm102, 0.0, %v101
    %v106 = vmul.f32 %v92, 0.8
    %v107 = vadd.f32 %v106, %v98
    %s108 = scalar_lea.vmem [#allocation8], %s96
    %109 = vst [vmem:[%s108] sm:$0xff] %v104
    %s110 = sadd.s32 0, 3
    %s111 = smul.u32 %s110, 8
    %s112 = scalar_lea.vmem [#allocation7], %s111
    %v113 = vld [vmem:[%s112] sm:$0xff]
    %v114 = vsub.f32 %v107, %v105
    %v115 = vmul.f32 %v114, 0.1
    %v116 = vadd.f32 %v105, %v115
    %vm117 = vcmp.gt.f32.partialorder %v116, 1.0
    %v118 = vsel %vm117, 1, 0
    %v119 = vcvt.s32.f32 %v118
    %v120 = vsel %vm117, 0.0, %v116
    %v121 = vmul.f32 %v107, 0.8
    %v122 = vadd.f32 %v121, %v113
    %s123 = scalar_lea.vmem [#allocation8], %s111
    %124 = vst [vmem:[%s123] sm:$0xff] %v119
    %s125 = sadd.s32 0, 4
    %s126 = smul.u32 %s125, 8
    %s127 = scalar_lea.vmem [#allocation7], %s126
    %v128 = vld [vmem:[%s127] sm:$0xff]
    %v129 = vsub.f32 %v122, %v120
    %v130 = vmul.f32 %v129, 0.1
    %v131 = vadd.f32 %v120, %v130
    %vm132 = vcmp.gt.f32.partialorder %v131, 1.0
    %v133 = vsel %vm132, 1, 0
    %v134 = vcvt.s32.f32 %v133
    %v135 = vsel %vm132, 0.0, %v131
    %v136 = vmul.f32 %v122, 0.8
    %v137 = vadd.f32 %v136, %v128
    %s138 = scalar_lea.vmem [#allocation8], %s126
    %139 = vst [vmem:[%s138] sm:$0xff] %v134
    %s140 = sadd.s32 0, 5
    %s141 = smul.u32 %s140, 8
    %s142 = scalar_lea.vmem [#allocation7], %s141
    %v143 = vld [vmem:[%s142] sm:$0xff]
    %v144 = vsub.f32 %v137, %v135
    %v145 = vmul.f32 %v144, 0.1
    %v146 = vadd.f32 %v135, %v145
    %vm147 = vcmp.gt.f32.partialorder %v146, 1.0
    %v148 = vsel %vm147, 1, 0
    %v149 = vcvt.s32.f32 %v148
    %v150 = vsel %vm147, 0.0, %v146
    %v151 = vmul.f32 %v137, 0.8
    %v152 = vadd.f32 %v151, %v143
    %s153 = scalar_lea.vmem [#allocation8], %s141
    %154 = vst [vmem:[%s153] sm:$0xff] %v149
    %s155 = sadd.s32 0, 6
    %s156 = smul.u32 %s155, 8
    %s157 = scalar_lea.vmem [#allocation7], %s156
    %v158 = vld [vmem:[%s157] sm:$0xff]
    %v159 = vsub.f32 %v152, %v150
    %v160 = vmul.f32 %v159, 0.1
    %v161 = vadd.f32 %v150, %v160
    %vm162 = vcmp.gt.f32.partialorder %v161, 1.0
    %v163 = vsel %vm162, 1, 0
    %v164 = vcvt.s32.f32 %v163
    %v165 = vsel %vm162, 0.0, %v161
    %v166 = vmul.f32 %v152, 0.8
    %v167 = vadd.f32 %v166, %v158
    %s168 = scalar_lea.vmem [#allocation8], %s156
    %169 = vst [vmem:[%s168] sm:$0xff] %v164
    %s170 = sadd.s32 0, 7
    %s171 = smul.u32 %s170, 8
    %s172 = scalar_lea.vmem [#allocation7], %s171
    %v173 = vld [vmem:[%s172] sm:$0xff]
    %v174 = vsub.f32 %v167, %v165
    %v175 = vmul.f32 %v174, 0.1
    %v176 = vadd.f32 %v165, %v175
    %vm177 = vcmp.gt.f32.partialorder %v176, 1.0
    %v178 = vsel %vm177, 1, 0
    %v179 = vcvt.s32.f32 %v178
    %v180 = vsel %vm177, 0.0, %v176
    %v181 = vmul.f32 %v167, 0.8
    %v182 = vadd.f32 %v181, %v173
    %s183 = scalar_lea.vmem [#allocation8], %s171
    %184 = vst [vmem:[%s183] sm:$0xff] %v179
    %185 = vst [vmem:[#allocation9] sm:$0xff] %v180
    %186 = vst [vmem:[#allocation11] sm:$0xff] %v182
    // Predicated region
    $region30: #{tpu_custom_call.1} parent=1 // pred_check
      _
    $region31: #{tpu_custom_call.1} parent=1 // pred_check_branch
      %188 = sbr.rel (0) target = $region33
    $region32: #{tpu_custom_call.1} parent=1 // pred_region
      %s190 = ssub.s32 1024, 1024
      %191 = vsyncadd [#allocation4], %s190
      %s192 = sshll.u32 [#allocation8], 4
      %s193 = int_to_ptr.vmem [resolvable:$true] %s192
      %198 = dma.vmem_to_hbm [thread:$0]  %s193, 1024, %s3, [#allocation4], 128, 128, 8
    $region33: #{tpu_custom_call.1} parent=1 // pred_fallthru
      _
    // Predicated region
    $region34: #{tpu_custom_call.1} parent=1 // pred_check
      _
    $region35: #{tpu_custom_call.1} parent=1 // pred_check_branch
      %200 = sbr.rel (0) target = $region37
    $region36: #{tpu_custom_call.1} parent=1 // pred_region
      %s202 = ssub.s32 128, 128
      %203 = vsyncadd [#allocation10], %s202
      %s205 = sshll.u32 [#allocation9], 4
      %s206 = int_to_ptr.vmem [resolvable:$true] %s205
      %208 = dma.vmem_to_hbm [thread:$0]  %s206, 128, %s4, [#allocation10]
    $region37: #{tpu_custom_call.1} parent=1 // pred_fallthru
      _
    // Predicated region
    $region38: #{tpu_custom_call.1} parent=1 // pred_check
      _
    $region39: #{tpu_custom_call.1} parent=1 // pred_check_branch
      %210 = sbr.rel (0) target = $region41
    $region40: #{tpu_custom_call.1} parent=1 // pred_region
      %s212 = ssub.s32 128, 128
      %213 = vsyncadd [#allocation10], %s212
      %s215 = sshll.u32 [#allocation11], 4
      %s216 = int_to_ptr.vmem [resolvable:$true] %s215
      %218 = dma.vmem_to_hbm [thread:$0]  %s216, 128, %s5, [#allocation10]
    $region41: #{tpu_custom_call.1} parent=1 // pred_fallthru
      _
    // Predicated region
    $region42: #{tpu_custom_call.1} parent=1 // pred_check
      _
    $region43: #{tpu_custom_call.1} parent=1 // pred_check_branch
      %220 = sbr.rel (0) target = $region45
    $region44: #{tpu_custom_call.1} parent=1 // pred_region
      %221 = dma.done [#allocation4], 1024
    $region45: #{tpu_custom_call.1} parent=1 // pred_fallthru
      _
    // Predicated region
    $region46: #{tpu_custom_call.1} parent=1 // pred_check
      _
    $region47: #{tpu_custom_call.1} parent=1 // pred_check_branch
      %223 = sbr.rel (0) target = $region49
    $region48: #{tpu_custom_call.1} parent=1 // pred_region
      %224 = dma.done [#allocation10], 128
    $region49: #{tpu_custom_call.1} parent=1 // pred_fallthru
      _
    // Predicated region
    $region50: #{tpu_custom_call.1} parent=1 // pred_check
      _
    $region51: #{tpu_custom_call.1} parent=1 // pred_check_branch
      %226 = sbr.rel (0) target = $region53
    $region52: #{tpu_custom_call.1} parent=1 // pred_region
      %227 = dma.done [#allocation10], 128
    $region53: #{tpu_custom_call.1} parent=1 // pred_fallthru
      _
    %228 = vsyncpa [#allocation3], 1
    %229 = vsyncpa [#allocation6], 1
    %230 = vsyncpa [#allocation4], 1
    %231 = vsyncpa [#allocation10], 1

</llo_original>
